<compile_context>
chip_gen: v7x
topology: tpu7x:2x2x1
jax: 0.10.0
libtpu: 0.0.40
codegen_flags: <defaults>
</compile_context>

<pallas_src>
import jax
import jax.numpy as jnp
from jax import lax
from jax.experimental import pallas as pl
from jax.experimental.pallas import tpu as pltpu  # noqa: F401  (TPU backend)


# ---------------------------------------------------------------------------
# Fused kernel: TransProb1 -> GNN1 -> TransProb2 -> GNN2 (all in VMEM)
# ---------------------------------------------------------------------------
def _gnn_layer_kernel(hd_ref, mask_ref,
                      A1_ref, b11_ref, b21_ref, W1_ref,
                      A2_ref, b12_ref, b22_ref, W2_ref,
                      hd_out_ref, alpha1_ref, alpha2_ref):
    D = A1_ref.shape[0]
    mask = mask_ref[...]                       # [N, N] = 1 - eye (enforces j != i)

    def trans_prob(hd, A, b1, b2):
        head = hd[:, :D]                       # [N, D]
        dep = hd[:, D:]                        # [N, D]
        # Fold the `dep @ b2` row bias into the dual matmul:
        #   (head @ A + b2) . dep[j]  ==  (head @ A @ dep^T)[i,j] + (dep @ b2)[j]
        hA = jnp.dot(head, A, preferred_element_type=jnp.float32) + b2   # [N, D]
        # Contract both operands on the feature axis (== hA @ dep^T) so the MXU
        # consumes dep untransposed (no XLU transpose of an [N, D] tile).
        x = lax.dot_general(hA, dep, (((1,), (1,)), ((), ())),
                            preferred_element_type=jnp.float32)          # [N, N]
        # `head @ b1` column bias on the VPU/XLU (no extra MXU pass).
        x = x + jnp.sum(head * b1, axis=1, keepdims=True)
        # Row-wise softmax (exact reciprocal: keeps the 1e-3 check comfortable).
        m = jnp.max(x, axis=1, keepdims=True)
        e = jnp.exp(x - m)
        return e * pl.reciprocal(jnp.sum(e, axis=1, keepdims=True), approx=False)

    def soft_gnn(hd, alpha, w_blk):
        head = hd[:, :D]
        dep = hd[:, D:]
        a = alpha * mask                       # zero diagonal (j != i)
        at = a.T                               # tiny [N, N] transpose only
        dh = jnp.concatenate([dep, head], axis=1)                         # [N, 2D]
        # S = [head_agg | dep_agg] = a^T @ [head|dep] + a @ [dep|head]
        S = (jnp.dot(at, hd, preferred_element_type=jnp.float32)
             + jnp.dot(a, dh, preferred_element_type=jnp.float32))        # [N, 2D]
        # Combine: [head_agg | dep_agg | head | dep] @ block weights -> [h | d]
        Z = jnp.concatenate([S, hd], axis=1)                              # [N, 4D]
        pre = jnp.dot(Z, w_blk, preferred_element_type=jnp.float32)       # [N, 2D]
        return jnp.where(pre > 0, pre, 0.1 * pre)                         # LeakyReLU(0.1)

    hd0 = hd_ref[...]                                                     # [N, 2D]

    alpha1 = trans_prob(hd0, A1_ref[...], b11_ref[...], b21_ref[...])
    alpha1_ref[...] = alpha1
    hd1 = soft_gnn(hd0, alpha1, W1_ref[...])

    alpha2 = trans_prob(hd1, A2_ref[...], b12_ref[...], b22_ref[...])
    alpha2_ref[...] = alpha2
    hd_out_ref[...] = soft_gnn(hd1, alpha2, W2_ref[...])


# ---------------------------------------------------------------------------
# Wrapper (one pallas_call for the whole layer; everything fits in VMEM)
# ---------------------------------------------------------------------------
def _full_spec(shape):
    return pl.BlockSpec(shape, lambda: (0,) * len(shape))


def _block_combine_weights(w_agg_h, w_agg_d, w_comb_h, w_comb_d):
    """[4D, 2D] block weights so [head_agg|dep_agg|head|dep] @ W = [h_pre|d_pre]."""
    d = w_agg_h.shape[0]
    z = jnp.zeros((d, d), jnp.float32)
    return jnp.concatenate([
        jnp.concatenate([w_agg_h, z], axis=1),
        jnp.concatenate([z, w_agg_d], axis=1),
        jnp.concatenate([w_comb_h, z], axis=1),
        jnp.concatenate([z, w_comb_d], axis=1)], axis=0)


@jax.jit
def gnn_layer(head, dependent, params):
    p = params
    n, d = head.shape
    hd = jnp.concatenate([head, dependent], axis=1)          # [N, 2D] packed
    mask = 1.0 - jnp.eye(n, dtype=jnp.float32)               # hoisted diag mask
    w1 = _block_combine_weights(p["g1_agg_h"], p["g1_agg_d"],
                                p["g1_comb_h"], p["g1_comb_d"])
    w2 = _block_combine_weights(p["g2_agg_h"], p["g2_agg_d"],
                                p["g2_comb_h"], p["g2_comb_d"])
    b11 = p["tp1_b1"].reshape(1, d)
    b21 = p["tp1_b2"].reshape(1, d)
    b12 = p["tp2_b1"].reshape(1, d)
    b22 = p["tp2_b2"].reshape(1, d)

    hd_out, alpha1, alpha2 = pl.pallas_call(
        _gnn_layer_kernel,
        out_shape=(jax.ShapeDtypeStruct((n, 2 * d), jnp.float32),
                   jax.ShapeDtypeStruct((n, n), jnp.float32),
                   jax.ShapeDtypeStruct((n, n), jnp.float32)),
        in_specs=[_full_spec((n, 2 * d)), _full_spec((n, n)),
                  _full_spec((d, d)), _full_spec((1, d)), _full_spec((1, d)),
                  _full_spec((4 * d, 2 * d)),
                  _full_spec((d, d)), _full_spec((1, d)), _full_spec((1, d)),
                  _full_spec((4 * d, 2 * d))],
        out_specs=(_full_spec((n, 2 * d)), _full_spec((n, n)), _full_spec((n, n))),
    )(hd, mask, p["tp1_A"], b11, b21, w1, p["tp2_A"], b12, b22, w2)

    # TODO(synk): if a batch-of-graphs dimension is ever added, expose it as a
    # leading "parallel" grid axis (and pad outputs lane-dense) for v7x's 2 TCs.
    return hd_out[:, :d], hd_out[:, d:], alpha1, alpha2


# ---------------------------------------------------------------------------
# Pure-JAX reference (for a correctness check)
# ---------------------------------------------------------------------------
def _ref_transprob(head, dep, A, b1, b2):
    x = head @ A @ dep.T + (head @ b1)[:, None] + (dep @ b2)[None, :]
    return jax.nn.softmax(x, axis=1)


def _ref_gnn(head, dep, alpha, wah, wad, wch, wcd):
    n = alpha.shape[0]
    a = alpha * (1.0 - jnp.eye(n, dtype=alpha.dtype))
    head_agg = a.T @ head + a @ dep
    dep_agg = a @ head + a.T @ dep
    lrelu = lambda v: jnp.where(v > 0, v, 0.1 * v)
    return lrelu(head_agg @ wah + head @ wch), lrelu(dep_agg @ wad + dep @ wcd)


def _ref_layer(head, dep, p):
    a1 = _ref_transprob(head, dep, p["tp1_A"], p["tp1_b1"], p["tp1_b2"])
    head, dep = _ref_gnn(head, dep, a1, p["g1_agg_h"], p["g1_agg_d"],
                         p["g1_comb_h"], p["g1_comb_d"])
    a2 = _ref_transprob(head, dep, p["tp2_A"], p["tp2_b1"], p["tp2_b2"])
    head, dep = _ref_gnn(head, dep, a2, p["g2_agg_h"], p["g2_agg_d"],
                         p["g2_comb_h"], p["g2_comb_d"])
    return head, dep, a1, a2


# ---------------------------------------------------------------------------
if __name__ == "__main__":
    N = 8        # number of vertices (rows of head/dependent)
    D = 32       # input_dim

    key = jax.random.PRNGKey(0)
    keys = jax.random.split(key, 16)

    # torch.rand -> uniform[0, 1)
    params = {
        "tp1_A":     jax.random.uniform(keys[0], (D, D), jnp.float32),
        "tp1_b1":    jax.random.uniform(keys[1], (D,), jnp.float32),
        "tp1_b2":    jax.random.uniform(keys[2], (D,), jnp.float32),
        "tp2_A":     jax.random.uniform(keys[3], (D, D), jnp.float32),
        "tp2_b1":    jax.random.uniform(keys[4], (D,), jnp.float32),
        "tp2_b2":    jax.random.uniform(keys[5], (D,), jnp.float32),
        "g1_agg_h":  jax.random.uniform(keys[6], (D, D), jnp.float32),
        "g1_agg_d":  jax.random.uniform(keys[7], (D, D), jnp.float32),
        "g1_comb_h": jax.random.uniform(keys[8], (D, D), jnp.float32),
        "g1_comb_d": jax.random.uniform(keys[9], (D, D), jnp.float32),
        "g2_agg_h":  jax.random.uniform(keys[10], (D, D), jnp.float32),
        "g2_agg_d":  jax.random.uniform(keys[11], (D, D), jnp.float32),
        "g2_comb_h": jax.random.uniform(keys[12], (D, D), jnp.float32),
        "g2_comb_d": jax.random.uniform(keys[13], (D, D), jnp.float32),
    }

    head = jax.random.normal(keys[14], (N, D), jnp.float32)
    dependent = jax.random.normal(keys[15], (N, D), jnp.float32)

    out = jax.block_until_ready(gnn_layer(head, dependent, params))
    ref = jax.block_until_ready(_ref_layer(head, dependent, params))

    import numpy as np
    # f32 check; tolerance allows for reassociation from the packed/fused matmuls
    # (block-weight combine, folded biases) vs. the straight-line reference.
    for o, r in zip(out, ref):
        np.testing.assert_allclose(np.asarray(o), np.asarray(r),
                                   rtol=1e-3, atol=1e-3)

    print("KERNEL_OK")
</pallas_src>

<mosaic_0001>
module attributes {stable_mosaic.version = 11 : i64} {
  func.func @_gnn_layer_kernel(%arg0: memref<8x64xf32, #tpu.memory_space<vmem>>, %arg1: memref<8x8xf32, #tpu.memory_space<vmem>>, %arg2: memref<32x32xf32, #tpu.memory_space<vmem>>, %arg3: memref<1x32xf32, #tpu.memory_space<vmem>>, %arg4: memref<1x32xf32, #tpu.memory_space<vmem>>, %arg5: memref<128x64xf32, #tpu.memory_space<vmem>>, %arg6: memref<32x32xf32, #tpu.memory_space<vmem>>, %arg7: memref<1x32xf32, #tpu.memory_space<vmem>>, %arg8: memref<1x32xf32, #tpu.memory_space<vmem>>, %arg9: memref<128x64xf32, #tpu.memory_space<vmem>>, %arg10: memref<8x64xf32, #tpu.memory_space<vmem>>, %arg11: memref<8x8xf32, #tpu.memory_space<vmem>>, %arg12: memref<8x8xf32, #tpu.memory_space<vmem>>) attributes {dimension_semantics = [], scalar_prefetch = 0 : i64, scratch_operands = 0 : i64, tpu.core_type = #tpu.core_type<tc>} {
    %c0 = arith.constant 0 : index
    %c0_0 = arith.constant 0 : index
    %0 = vector.load %arg1[%c0, %c0_0] : memref<8x8xf32, #tpu.memory_space<vmem>>, vector<8x8xf32>
    %c0_1 = arith.constant 0 : index
    %c0_2 = arith.constant 0 : index
    %1 = vector.load %arg0[%c0_1, %c0_2] : memref<8x64xf32, #tpu.memory_space<vmem>>, vector<8x64xf32>
    %c0_3 = arith.constant 0 : index
    %c0_4 = arith.constant 0 : index
    %2 = vector.load %arg2[%c0_3, %c0_4] : memref<32x32xf32, #tpu.memory_space<vmem>>, vector<32x32xf32>
    %c0_5 = arith.constant 0 : index
    %c0_6 = arith.constant 0 : index
    %3 = vector.load %arg3[%c0_5, %c0_6] : memref<1x32xf32, #tpu.memory_space<vmem>>, vector<1x32xf32>
    %c0_7 = arith.constant 0 : index
    %c0_8 = arith.constant 0 : index
    %4 = vector.load %arg4[%c0_7, %c0_8] : memref<1x32xf32, #tpu.memory_space<vmem>>, vector<1x32xf32>
    %5 = vector.extract_strided_slice %1 {offsets = [0, 0], sizes = [8, 32], strides = [1, 1]} : vector<8x64xf32> to vector<8x32xf32>
    %6 = vector.extract_strided_slice %1 {offsets = [0, 32], sizes = [8, 32], strides = [1, 1]} : vector<8x64xf32> to vector<8x32xf32>
    %cst = arith.constant dense<0.000000e+00> : vector<8x32xf32>
    %7 = tpu.matmul %5, %2, %cst {dimension_numbers = #tpu.dot_dimension_numbers<[1], [0], [0], [1], [0, 0, 1, 1], [], []>} : vector<8x32xf32>, vector<32x32xf32>, vector<8x32xf32> -> vector<8x32xf32>
    %8 = vector.broadcast %4 : vector<1x32xf32> to vector<8x32xf32>
    %9 = arith.addf %7, %8 : vector<8x32xf32>
    %cst_9 = arith.constant dense<0.000000e+00> : vector<8x8xf32>
    %10 = tpu.matmul %9, %6, %cst_9 {dimension_numbers = #tpu.dot_dimension_numbers<[1], [1], [0], [0], [0, 0, 1, 0], [], []>} : vector<8x32xf32>, vector<8x32xf32>, vector<8x8xf32> -> vector<8x8xf32>
    %11 = vector.broadcast %3 : vector<1x32xf32> to vector<8x32xf32>
    %12 = arith.mulf %5, %11 : vector<8x32xf32>
    %cst_10 = arith.constant dense<0.000000e+00> : vector<8xf32>
    %13 = vector.multi_reduction <add>, %12, %cst_10 [1] : vector<8x32xf32> to vector<8xf32>
    %14 = vector.shape_cast %13 : vector<8xf32> to vector<8x1xf32>
    %15 = vector.broadcast %14 : vector<8x1xf32> to vector<8x8xf32>
    %16 = arith.addf %10, %15 : vector<8x8xf32>
    %cst_11 = arith.constant dense<0xFF800000> : vector<8xf32>
    %17 = vector.multi_reduction <maximumf>, %16, %cst_11 [1] : vector<8x8xf32> to vector<8xf32>
    %18 = vector.shape_cast %17 : vector<8xf32> to vector<8x1xf32>
    %19 = vector.broadcast %18 : vector<8x1xf32> to vector<8x8xf32>
    %20 = arith.subf %16, %19 : vector<8x8xf32>
    %21 = math.exp %20 : vector<8x8xf32>
    %cst_12 = arith.constant dense<0.000000e+00> : vector<8xf32>
    %22 = vector.multi_reduction <add>, %21, %cst_12 [1] : vector<8x8xf32> to vector<8xf32>
    %23 = vector.shape_cast %22 : vector<8xf32> to vector<8x1xf32>
    %24 = tpu.reciprocal %23 : vector<8x1xf32> -> vector<8x1xf32>
    %25 = vector.broadcast %24 : vector<8x1xf32> to vector<8x8xf32>
    %26 = arith.mulf %21, %25 : vector<8x8xf32>
    %c0_13 = arith.constant 0 : index
    %c0_14 = arith.constant 0 : index
    %27 = vector.load %arg11[%c0_13, %c0_14] : memref<8x8xf32, #tpu.memory_space<vmem>>, vector<8x8xf32>
    tpu.vector_store %arg11[%c0_13, %c0_14], %26 {strides = array<i32>} : memref<8x8xf32, #tpu.memory_space<vmem>>, vector<8x8xf32>,
    %c0_15 = arith.constant 0 : index
    %c0_16 = arith.constant 0 : index
    %28 = vector.load %arg5[%c0_15, %c0_16] : memref<128x64xf32, #tpu.memory_space<vmem>>, vector<128x64xf32>
    %29 = vector.extract_strided_slice %1 {offsets = [0, 0], sizes = [8, 32], strides = [1, 1]} : vector<8x64xf32> to vector<8x32xf32>
    %30 = vector.extract_strided_slice %1 {offsets = [0, 32], sizes = [8, 32], strides = [1, 1]} : vector<8x64xf32> to vector<8x32xf32>
    %31 = arith.mulf %26, %0 : vector<8x8xf32>
    %32 = tpu.transpose %31, [1, 0] : vector<8x8xf32> -> vector<8x8xf32>
    %33 = tpu.concatenate %30, %29 in 1 : vector<8x32xf32>, vector<8x32xf32> -> vector<8x64xf32>
    %cst_17 = arith.constant dense<0.000000e+00> : vector<8x64xf32>
    %34 = tpu.matmul %32, %1, %cst_17 {dimension_numbers = #tpu.dot_dimension_numbers<[1], [0], [0], [1], [0, 0, 1, 1], [], []>} : vector<8x8xf32>, vector<8x64xf32>, vector<8x64xf32> -> vector<8x64xf32>
    %cst_18 = arith.constant dense<0.000000e+00> : vector<8x64xf32>
    %35 = tpu.matmul %31, %33, %cst_18 {dimension_numbers = #tpu.dot_dimension_numbers<[1], [0], [0], [1], [0, 0, 1, 1], [], []>} : vector<8x8xf32>, vector<8x64xf32>, vector<8x64xf32> -> vector<8x64xf32>
    %36 = arith.addf %34, %35 : vector<8x64xf32>
    %37 = tpu.concatenate %36, %1 in 1 : vector<8x64xf32>, vector<8x64xf32> -> vector<8x128xf32>
    %cst_19 = arith.constant dense<0.000000e+00> : vector<8x64xf32>
    %38 = tpu.matmul %37, %28, %cst_19 {dimension_numbers = #tpu.dot_dimension_numbers<[1], [0], [0], [1], [0, 0, 1, 1], [], []>} : vector<8x128xf32>, vector<128x64xf32>, vector<8x64xf32> -> vector<8x64xf32>
    %cst_20 = arith.constant 0.000000e+00 : f32
    %39 = vector.broadcast %cst_20 : f32 to vector<8x64xf32>
    %40 = arith.cmpf ogt, %38, %39 : vector<8x64xf32>
    %cst_21 = arith.constant 1.000000e-01 : f32
    %41 = vector.broadcast %cst_21 : f32 to vector<8x64xf32>
    %42 = arith.mulf %41, %38 : vector<8x64xf32>
    %43 = arith.select %40, %38, %42 : vector<8x64xi1>, vector<8x64xf32>
    %c0_22 = arith.constant 0 : index
    %c0_23 = arith.constant 0 : index
    %44 = vector.load %arg6[%c0_22, %c0_23] : memref<32x32xf32, #tpu.memory_space<vmem>>, vector<32x32xf32>
    %c0_24 = arith.constant 0 : index
    %c0_25 = arith.constant 0 : index
    %45 = vector.load %arg7[%c0_24, %c0_25] : memref<1x32xf32, #tpu.memory_space<vmem>>, vector<1x32xf32>
    %c0_26 = arith.constant 0 : index
    %c0_27 = arith.constant 0 : index
    %46 = vector.load %arg8[%c0_26, %c0_27] : memref<1x32xf32, #tpu.memory_space<vmem>>, vector<1x32xf32>
    %47 = vector.extract_strided_slice %43 {offsets = [0, 0], sizes = [8, 32], strides = [1, 1]} : vector<8x64xf32> to vector<8x32xf32>
    %48 = vector.extract_strided_slice %43 {offsets = [0, 32], sizes = [8, 32], strides = [1, 1]} : vector<8x64xf32> to vector<8x32xf32>
    %cst_28 = arith.constant dense<0.000000e+00> : vector<8x32xf32>
    %49 = tpu.matmul %47, %44, %cst_28 {dimension_numbers = #tpu.dot_dimension_numbers<[1], [0], [0], [1], [0, 0, 1, 1], [], []>} : vector<8x32xf32>, vector<32x32xf32>, vector<8x32xf32> -> vector<8x32xf32>
    %50 = vector.broadcast %46 : vector<1x32xf32> to vector<8x32xf32>
    %51 = arith.addf %49, %50 : vector<8x32xf32>
    %cst_29 = arith.constant dense<0.000000e+00> : vector<8x8xf32>
    %52 = tpu.matmul %51, %48, %cst_29 {dimension_numbers = #tpu.dot_dimension_numbers<[1], [1], [0], [0], [0, 0, 1, 0], [], []>} : vector<8x32xf32>, vector<8x32xf32>, vector<8x8xf32> -> vector<8x8xf32>
    %53 = vector.broadcast %45 : vector<1x32xf32> to vector<8x32xf32>
    %54 = arith.mulf %47, %53 : vector<8x32xf32>
    %cst_30 = arith.constant dense<0.000000e+00> : vector<8xf32>
    %55 = vector.multi_reduction <add>, %54, %cst_30 [1] : vector<8x32xf32> to vector<8xf32>
    %56 = vector.shape_cast %55 : vector<8xf32> to vector<8x1xf32>
    %57 = vector.broadcast %56 : vector<8x1xf32> to vector<8x8xf32>
    %58 = arith.addf %52, %57 : vector<8x8xf32>
    %cst_31 = arith.constant dense<0xFF800000> : vector<8xf32>
    %59 = vector.multi_reduction <maximumf>, %58, %cst_31 [1] : vector<8x8xf32> to vector<8xf32>
    %60 = vector.shape_cast %59 : vector<8xf32> to vector<8x1xf32>
    %61 = vector.broadcast %60 : vector<8x1xf32> to vector<8x8xf32>
    %62 = arith.subf %58, %61 : vector<8x8xf32>
    %63 = math.exp %62 : vector<8x8xf32>
    %cst_32 = arith.constant dense<0.000000e+00> : vector<8xf32>
    %64 = vector.multi_reduction <add>, %63, %cst_32 [1] : vector<8x8xf32> to vector<8xf32>
    %65 = vector.shape_cast %64 : vector<8xf32> to vector<8x1xf32>
    %66 = tpu.reciprocal %65 : vector<8x1xf32> -> vector<8x1xf32>
    %67 = vector.broadcast %66 : vector<8x1xf32> to vector<8x8xf32>
    %68 = arith.mulf %63, %67 : vector<8x8xf32>
    %c0_33 = arith.constant 0 : index
    %c0_34 = arith.constant 0 : index
    %69 = vector.load %arg12[%c0_33, %c0_34] : memref<8x8xf32, #tpu.memory_space<vmem>>, vector<8x8xf32>
    tpu.vector_store %arg12[%c0_33, %c0_34], %68 {strides = array<i32>} : memref<8x8xf32, #tpu.memory_space<vmem>>, vector<8x8xf32>,
    %c0_35 = arith.constant 0 : index
    %c0_36 = arith.constant 0 : index
    %70 = vector.load %arg9[%c0_35, %c0_36] : memref<128x64xf32, #tpu.memory_space<vmem>>, vector<128x64xf32>
    %71 = vector.extract_strided_slice %43 {offsets = [0, 0], sizes = [8, 32], strides = [1, 1]} : vector<8x64xf32> to vector<8x32xf32>
    %72 = vector.extract_strided_slice %43 {offsets = [0, 32], sizes = [8, 32], strides = [1, 1]} : vector<8x64xf32> to vector<8x32xf32>
    %73 = arith.mulf %68, %0 : vector<8x8xf32>
    %74 = tpu.transpose %73, [1, 0] : vector<8x8xf32> -> vector<8x8xf32>
    %75 = tpu.concatenate %72, %71 in 1 : vector<8x32xf32>, vector<8x32xf32> -> vector<8x64xf32>
    %cst_37 = arith.constant dense<0.000000e+00> : vector<8x64xf32>
    %76 = tpu.matmul %74, %43, %cst_37 {dimension_numbers = #tpu.dot_dimension_numbers<[1], [0], [0], [1], [0, 0, 1, 1], [], []>} : vector<8x8xf32>, vector<8x64xf32>, vector<8x64xf32> -> vector<8x64xf32>
    %cst_38 = arith.constant dense<0.000000e+00> : vector<8x64xf32>
    %77 = tpu.matmul %73, %75, %cst_38 {dimension_numbers = #tpu.dot_dimension_numbers<[1], [0], [0], [1], [0, 0, 1, 1], [], []>} : vector<8x8xf32>, vector<8x64xf32>, vector<8x64xf32> -> vector<8x64xf32>
    %78 = arith.addf %76, %77 : vector<8x64xf32>
    %79 = tpu.concatenate %78, %43 in 1 : vector<8x64xf32>, vector<8x64xf32> -> vector<8x128xf32>
    %cst_39 = arith.constant dense<0.000000e+00> : vector<8x64xf32>
    %80 = tpu.matmul %79, %70, %cst_39 {dimension_numbers = #tpu.dot_dimension_numbers<[1], [0], [0], [1], [0, 0, 1, 1], [], []>} : vector<8x128xf32>, vector<128x64xf32>, vector<8x64xf32> -> vector<8x64xf32>
    %cst_40 = arith.constant 0.000000e+00 : f32
    %81 = vector.broadcast %cst_40 : f32 to vector<8x64xf32>
    %82 = arith.cmpf ogt, %80, %81 : vector<8x64xf32>
    %cst_41 = arith.constant 1.000000e-01 : f32
    %83 = vector.broadcast %cst_41 : f32 to vector<8x64xf32>
    %84 = arith.mulf %83, %80 : vector<8x64xf32>
    %85 = arith.select %82, %80, %84 : vector<8x64xi1>, vector<8x64xf32>
    %c0_42 = arith.constant 0 : index
    %c0_43 = arith.constant 0 : index
    %86 = vector.load %arg10[%c0_42, %c0_43] : memref<8x64xf32, #tpu.memory_space<vmem>>, vector<8x64xf32>
    tpu.vector_store %arg10[%c0_42, %c0_43], %85 {strides = array<i32>} : memref<8x64xf32, #tpu.memory_space<vmem>>, vector<8x64xf32>,
    return
  }
}

</mosaic_0001>

<llo_original>
// kernel: gnn_layer.1
$region0: #{gnn_layer.1}
  #allocation0 [shape = 'u32[]', space=smem, size = 0x4, offset = 0x4, fixed_abs, tag = 'smem constant byte address 0x4 - core index']
  #allocation1 [shape = 'u32[144,128]{1,0:T(1,128)}', space=vmem, size = 0x12000, scoped, tag = 'internal scratch']
  %s0 = inlined_call_operand.vmem [shape: f32[8,64], index: 0, kind: input, shape index: {}]
  %s1 = inlined_call_operand.vmem [shape: f32[8,8], index: 1, kind: input, shape index: {}]
  %s2 = inlined_call_operand.vmem [shape: f32[32,32], index: 2, kind: input, shape index: {}]
  %s3 = inlined_call_operand.vmem [shape: f32[1,32], index: 3, kind: input, shape index: {}]
  %s4 = inlined_call_operand.vmem [shape: f32[1,32], index: 4, kind: input, shape index: {}]
  %s5 = inlined_call_operand.vmem [shape: f32[128,64], index: 5, kind: input, shape index: {}]
  %s6 = inlined_call_operand.vmem [shape: f32[32,32], index: 6, kind: input, shape index: {}]
  %s7 = inlined_call_operand.vmem [shape: f32[1,32], index: 7, kind: input, shape index: {}]
  %s8 = inlined_call_operand.vmem [shape: f32[1,32], index: 8, kind: input, shape index: {}]
  %s9 = inlined_call_operand.vmem [shape: f32[128,64], index: 9, kind: input, shape index: {}]
  %s10 = inlined_call_operand.vmem [shape: f32[8,64], index: 10, kind: output, shape index: {0}]
  %s11 = inlined_call_operand.hbm [shape: f32[8,8], index: 11, kind: output, shape index: {1}]
  %s12 = inlined_call_operand.hbm [shape: f32[8,8], index: 12, kind: output, shape index: {2}]
  %13 = xla_tuple %s10, %s11, %s12
  %s14 = sld [smem:[#allocation0]]
  $region66: #{gnn_layer.1} parent=0
    _
  %s16 = ssub.s32 1, %s14
  %s17 = scalar_select 0, %s16, %s14
  $region1: #{gnn_layer.1} parent=0
    #allocation2 [shape = 'u8[4096]{0}', space=vmem, size = 0x1000, scoped, tag = 'output window, operand 1, single buffered']
    #allocation3 [shape = 's32[1]{0}', space=sflag, size = 0x4, scoped, tag = 'scoped memory for gnn_layer.1']
    #allocation4 [shape = 'u8[4096]{0}', space=vmem, size = 0x1000, scoped, tag = 'output window, operand 2, single buffered']
    #allocation5 [shape = 's32[1]{0}', space=sflag, size = 0x4, scoped, tag = 'scoped memory for gnn_layer.1']
    %18 = vsyncpa [#allocation3], 0
    %19 = vsyncpa [#allocation5], 0
    // Predicated region
    $region2: #{gnn_layer.1} parent=1 // pred_check
      _
    $region3: #{gnn_layer.1} parent=1 // pred_check_branch
      %21 = sbr.rel (0) target = $region5
    $region4: #{gnn_layer.1} parent=1 // pred_region
      _
    $region5: #{gnn_layer.1} parent=1 // pred_fallthru
      _
    // Predicated region
    $region6: #{gnn_layer.1} parent=1 // pred_check
      _
    $region7: #{gnn_layer.1} parent=1 // pred_check_branch
      %23 = sbr.rel (0) target = $region9
    $region8: #{gnn_layer.1} parent=1 // pred_region
      _
    $region9: #{gnn_layer.1} parent=1 // pred_fallthru
      _
    // Predicated region
    $region10: #{gnn_layer.1} parent=1 // pred_check
      _
    $region11: #{gnn_layer.1} parent=1 // pred_check_branch
      %25 = sbr.rel (0) target = $region13
    $region12: #{gnn_layer.1} parent=1 // pred_region
      _
    $region13: #{gnn_layer.1} parent=1 // pred_fallthru
      _
    // Predicated region
    $region14: #{gnn_layer.1} parent=1 // pred_check
      _
    $region15: #{gnn_layer.1} parent=1 // pred_check_branch
      %27 = sbr.rel (0) target = $region17
    $region16: #{gnn_layer.1} parent=1 // pred_region
      _
    $region17: #{gnn_layer.1} parent=1 // pred_fallthru
      _
    // Predicated region
    $region18: #{gnn_layer.1} parent=1 // pred_check
      _
    $region19: #{gnn_layer.1} parent=1 // pred_check_branch
      %29 = sbr.rel (0) target = $region21
    $region20: #{gnn_layer.1} parent=1 // pred_region
      _
    $region21: #{gnn_layer.1} parent=1 // pred_fallthru
      _
    // Predicated region
    $region22: #{gnn_layer.1} parent=1 // pred_check
      _
    $region23: #{gnn_layer.1} parent=1 // pred_check_branch
      %31 = sbr.rel (0) target = $region25
    $region24: #{gnn_layer.1} parent=1 // pred_region
      _
    $region25: #{gnn_layer.1} parent=1 // pred_fallthru
      _
    // Predicated region
    $region26: #{gnn_layer.1} parent=1 // pred_check
      _
    $region27: #{gnn_layer.1} parent=1 // pred_check_branch
      %33 = sbr.rel (0) target = $region29
    $region28: #{gnn_layer.1} parent=1 // pred_region
      _
    $region29: #{gnn_layer.1} parent=1 // pred_fallthru
      _
    // Predicated region
    $region30: #{gnn_layer.1} parent=1 // pred_check
      _
    $region31: #{gnn_layer.1} parent=1 // pred_check_branch
      %35 = sbr.rel (0) target = $region33
    $region32: #{gnn_layer.1} parent=1 // pred_region
      _
    $region33: #{gnn_layer.1} parent=1 // pred_fallthru
      _
    // Predicated region
    $region34: #{gnn_layer.1} parent=1 // pred_check
      _
    $region35: #{gnn_layer.1} parent=1 // pred_check_branch
      %37 = sbr.rel (0) target = $region37
    $region36: #{gnn_layer.1} parent=1 // pred_region
      _
    $region37: #{gnn_layer.1} parent=1 // pred_fallthru
      _
    // Predicated region
    $region38: #{gnn_layer.1} parent=1 // pred_check
      _
    $region39: #{gnn_layer.1} parent=1 // pred_check_branch
      %39 = sbr.rel (0) target = $region41
    $region40: #{gnn_layer.1} parent=1 // pred_region
      _
    $region41: #{gnn_layer.1} parent=1 // pred_fallthru
      _
    %v40 = vld [vmem:[%s1] sm:$0xff]
    %v41 = vld [vmem:[%s0] sm:$0xff]
    %v42 = vld [vmem:[%s2] sm:$0xff]
    %v43 = vld [vmem:[%s2 + $0x8] sm:$0xff]
    %v44 = vld [vmem:[%s2 + $0x10] sm:$0xff]
    %v45 = vld [vmem:[%s2 + $0x18] sm:$0xff]
    %v46 = vld [vmem:[%s3] sm:$0x1]
    %v47 = vld [vmem:[%s4] sm:$0x1]
    %v49 = vlaneseq
    %v50 = vshrl.u32 %v49, 7
    %v51 = vsub.s32 0, %v50
    %v52 = vrot.slane %v47, %v51
    %vm54 = vcmask 261120
    %v56 = vsel %vm54, %v41, 0
    %58 = vmatprep.subr.mxu0 0.0
    %59 = vmatpush1.msra.mxu0 %v42
    %60 = vmatprep.subr.mxu0 0.0
    %61 = vmatpush1.msra.mxu0 %v43
    %62 = vmatprep.subr.mxu0 0.0
    %63 = vmatpush1.msra.mxu0 %v44
    %64 = vmatprep.subr.mxu0 0.0
    %65 = vmatpush1.msra.mxu0 %v45
    %66 = vmatprep.subr.mxu0 0.0
    %67 = vmatpush1.msra.mxu0 0.0
    %68 = vmatprep.subr.mxu0 0.0
    %69 = vmatpush1.msra.mxu0 0.0
    %70 = vmatprep.subr.mxu0 0.0
    %71 = vmatpush1.msra.mxu0 0.0
    %72 = vmatprep.subr.mxu0 0.0
    %73 = vmatpush1.msra.mxu0 0.0
    %74 = vmatprep.subr.mxu0 0.0
    %75 = vmatpush1.msra.mxu0 0.0
    %76 = vmatprep.subr.mxu0 0.0
    %77 = vmatpush1.msra.mxu0 0.0
    %78 = vmatprep.subr.mxu0 0.0
    %79 = vmatpush1.msra.mxu0 0.0
    %80 = vmatprep.subr.mxu0 0.0
    %81 = vmatpush1.msra.mxu0 0.0
    %82 = vmatprep.subr.mxu0 0.0
    %83 = vmatpush1.msra.mxu0 0.0
    %84 = vmatprep.subr.mxu0 0.0
    %85 = vmatpush1.msra.mxu0 0.0
    %86 = vmatprep.subr.mxu0 0.0
    %87 = vmatpush1.msra.mxu0 0.0
    %88 = vmatprep.subr.mxu0 0.0
    %89 = vmatpush1.msra.mxu0 0.0
    %90 = vmatprep.subr.mxu0 0.0
    %91 = vmatpush1.msra.mxu0 0.0
    %92 = vmatprep.subr.mxu0 0.0
    %93 = vmatpush1.msra.mxu0 0.0
    %94 = vmatprep.subr.mxu0 0.0
    %95 = vmatpush1.msra.mxu0 0.0
    %96 = vmatprep.subr.mxu0 0.0
    %97 = vmatpush1.msra.mxu0 0.0
    %98 = vmatprep.subr.mxu0 0.0
    %99 = vmatpush1.msra.mxu0 0.0
    %100 = vmatprep.subr.mxu0 0.0
    %101 = vmatpush1.msra.mxu0 0.0
    %102 = vmatprep.subr.mxu0 0.0
    %103 = vmatpush1.msra.mxu0 0.0
    %104 = vmatprep.subr.mxu0 0.0
    %105 = vmatpush1.msra.mxu0 0.0
    %106 = vmatprep.subr.mxu0 0.0
    %107 = vmatpush1.msra.mxu0 0.0
    %108 = vmatprep.subr.mxu0 0.0
    %109 = vmatpush1.msra.mxu0 0.0
    %110 = vmatprep.subr.mxu0 0.0
    %111 = vmatpush1.msra.mxu0 0.0
    %112 = vmatprep.subr.mxu0 0.0
    %113 = vmatpush1.msra.mxu0 0.0
    %114 = vmatprep.subr.mxu0 0.0
    %115 = vmatpush1.msra.mxu0 0.0
    %116 = vmatprep.subr.mxu0 0.0
    %117 = vmatpush1.msra.mxu0 0.0
    %118 = vmatprep.subr.mxu0 0.0
    %119 = vmatpush1.msra.mxu0 0.0
    %120 = vmatprep.subr.mxu0 0.0
    %121 = vmatpush1.msra.mxu0 0.0
    %122 = vmatprep.mubr.f32.mxu0 0.0
    %123 = vmatmul.mubr.f32.gmra.mrb[0].mxu0 %v56
    %v124 = vpop.f32.mrb[0].mxu0
    %v125 = vadd.f32 %v52, %v124
    %v126 = vpop.f32.mrb[0].mxu0
    %127 = vdwg.mxu0
    %v129 = vlaneseq
    %v130 = vshrl.u32 %v129, 7
    %v131 = vsub.s32 0, %v130
    %v132 = vrot.slane %v46, %v131
    %v134 = vmul.f32 %v41, %v132
    %v135 = vsel %vm54, %v134, 0.0
    %136 = vadd.xlane.f32.xlu0 %v135
    %v137 = vpop.xlane.xlu0 %136
    %138 = vrot.lane.b32.xlu0 %v41, 96
    %v139 = vpop.permute.xlu0 %138
    %v141 = vsel %vm54, %v125, 0
    %v143 = vsel %vm54, %v139, 0
    %145 = vmatprep.subr.mxu0 0.0
    %146 = vmatpush1.xpose.msra.mxu0 %v143
    %147 = vmatprep.subr.mxu0 0.0
    %148 = vmatpush1.xpose.msra.mxu0 0.0
    %149 = vmatprep.subr.mxu0 0.0
    %150 = vmatpush1.xpose.msra.mxu0 0.0
    %151 = vmatprep.subr.mxu0 0.0
    %152 = vmatpush1.xpose.msra.mxu0 0.0
    %153 = vmatprep.subr.mxu0 0.0
    %154 = vmatpush1.xpose.msra.mxu0 0.0
    %155 = vmatprep.subr.mxu0 0.0
    %156 = vmatpush1.xpose.msra.mxu0 0.0
    %157 = vmatprep.subr.mxu0 0.0
    %158 = vmatpush1.xpose.msra.mxu0 0.0
    %159 = vmatprep.subr.mxu0 0.0
    %160 = vmatpush1.xpose.msra.mxu0 0.0
    %161 = vmatprep.subr.mxu0 0.0
    %162 = vmatpush1.xpose.msra.mxu0 0.0
    %163 = vmatprep.subr.mxu0 0.0
    %164 = vmatpush1.xpose.msra.mxu0 0.0
    %165 = vmatprep.subr.mxu0 0.0
    %166 = vmatpush1.xpose.msra.mxu0 0.0
    %167 = vmatprep.subr.mxu0 0.0
    %168 = vmatpush1.xpose.msra.mxu0 0.0
    %169 = vmatprep.subr.mxu0 0.0
    %170 = vmatpush1.xpose.msra.mxu0 0.0
    %171 = vmatprep.subr.mxu0 0.0
    %172 = vmatpush1.xpose.msra.mxu0 0.0
    %173 = vmatprep.subr.mxu0 0.0
    %174 = vmatpush1.xpose.msra.mxu0 0.0
    %175 = vmatprep.subr.mxu0 0.0
    %176 = vmatpush1.xpose.msra.mxu0 0.0
    %177 = vmatprep.subr.mxu0 0.0
    %178 = vmatpush1.xpose.msra.mxu0 0.0
    %179 = vmatprep.subr.mxu0 0.0
    %180 = vmatpush1.xpose.msra.mxu0 0.0
    %181 = vmatprep.subr.mxu0 0.0
    %182 = vmatpush1.xpose.msra.mxu0 0.0
    %183 = vmatprep.subr.mxu0 0.0
    %184 = vmatpush1.xpose.msra.mxu0 0.0
    %185 = vmatprep.subr.mxu0 0.0
    %186 = vmatpush1.xpose.msra.mxu0 0.0
    %187 = vmatprep.subr.mxu0 0.0
    %188 = vmatpush1.xpose.msra.mxu0 0.0
    %189 = vmatprep.subr.mxu0 0.0
    %190 = vmatpush1.xpose.msra.mxu0 0.0
    %191 = vmatprep.subr.mxu0 0.0
    %192 = vmatpush1.xpose.msra.mxu0 0.0
    %193 = vmatprep.subr.mxu0 0.0
    %194 = vmatpush1.xpose.msra.mxu0 0.0
    %195 = vmatprep.subr.mxu0 0.0
    %196 = vmatpush1.xpose.msra.mxu0 0.0
    %197 = vmatprep.subr.mxu0 0.0
    %198 = vmatpush1.xpose.msra.mxu0 0.0
    %199 = vmatprep.subr.mxu0 0.0
    %200 = vmatpush1.xpose.msra.mxu0 0.0
    %201 = vmatprep.subr.mxu0 0.0
    %202 = vmatpush1.xpose.msra.mxu0 0.0
    %203 = vmatprep.subr.mxu0 0.0
    %204 = vmatpush1.xpose.msra.mxu0 0.0
    %205 = vmatprep.subr.mxu0 0.0
    %206 = vmatpush1.xpose.msra.mxu0 0.0
    %207 = vmatprep.subr.mxu0 0.0
    %208 = vmatpush1.xpose.msra.mxu0 0.0
    %209 = vmatprep.mubr.f32.mxu0 0.0
    %210 = vmatmul.mubr.f32.gmra.mrb[0].mxu0 %v141
    %v211 = vpop.f32.mrb[0].mxu0
    %v212 = vadd.f32 %v137, %v211
    %v213 = vpop.f32.mrb[0].mxu0
    %214 = vdwg.mxu0
    %vm215 = vcmask 64512
    %v216 = vsel %vm215, %v212, -inf
    %217 = vmax.xlane.f32.xlu0 %v216
    %v218 = vpop.xlane.xlu0 %217
    %v219 = vsub.f32 %v212, %v218
    %v220 = vmul.f32 %v219, 1.442695
    %v221 = vpow.pop %v220
    %v222 = vsel %vm215, %v221, 0.0
    %223 = vadd.xlane.f32.xlu0 %v222
    %v224 = vpop.xlane.xlu0 %223
    %v225 = vrcp.pop %v224
    %v226 = vmul.f32 %v221, %v225
    %227 = vst.msk [vmem:[#allocation2] sm:$0xff] %vm215, %v226
    %v228 = vld [vmem:[%s5] sm:$0xff]
    %v229 = vld [vmem:[%s5 + $0x8] sm:$0xff]
    %v230 = vld [vmem:[%s5 + $0x10] sm:$0xff]
    %v231 = vld [vmem:[%s5 + $0x18] sm:$0xff]
    %v232 = vld [vmem:[%s5 + $0x20] sm:$0xff]
    %v233 = vld [vmem:[%s5 + $0x28] sm:$0xff]
    %v234 = vld [vmem:[%s5 + $0x30] sm:$0xff]
    %v235 = vld [vmem:[%s5 + $0x38] sm:$0xff]
    %v236 = vld [vmem:[%s5 + $0x40] sm:$0xff]
    %v237 = vld [vmem:[%s5 + $0x48] sm:$0xff]
    %v238 = vld [vmem:[%s5 + $0x50] sm:$0xff]
    %v239 = vld [vmem:[%s5 + $0x58] sm:$0xff]
    %v240 = vld [vmem:[%s5 + $0x60] sm:$0xff]
    %v241 = vld [vmem:[%s5 + $0x68] sm:$0xff]
    %v242 = vld [vmem:[%s5 + $0x70] sm:$0xff]
    %v243 = vld [vmem:[%s5 + $0x78] sm:$0xff]
    %v244 = vmul.f32 %v226, %v40
    %245 = vxpose.xlu0.b32.start [1/16] %v244, 128
    %246 = vxpose.xlu0.b32.cont [2/16] 0.0, 128
    %247 = vxpose.xlu0.b32.cont [3/16] 0.0, 128
    %248 = vxpose.xlu0.b32.cont [4/16] 0.0, 128
    %249 = vxpose.xlu0.b32.cont [5/16] 0.0, 128
    %250 = vxpose.xlu0.b32.cont [6/16] 0.0, 128
    %251 = vxpose.xlu0.b32.cont [7/16] 0.0, 128
    %252 = vxpose.xlu0.b32.cont [8/16] 0.0, 128
    %253 = vxpose.xlu0.b32.cont [9/16] 0.0, 128
    %254 = vxpose.xlu0.b32.cont [10/16] 0.0, 128
    %255 = vxpose.xlu0.b32.cont [11/16] 0.0, 128
    %256 = vxpose.xlu0.b32.cont [12/16] 0.0, 128
    %257 = vxpose.xlu0.b32.cont [13/16] 0.0, 128
    %258 = vxpose.xlu0.b32.cont [14/16] 0.0, 128
    %259 = vxpose.xlu0.b32.cont [15/16] 0.0, 128
    %260 = vxpose.xlu0.b32.end [16/16] 0.0, 128
    %v261 = vpop.trf.xlu0
    %v262 = vpop.trf.xlu0
    %v263 = vpop.trf.xlu0
    %v264 = vpop.trf.xlu0
    %v265 = vpop.trf.xlu0
    %v266 = vpop.trf.xlu0
    %v267 = vpop.trf.xlu0
    %v268 = vpop.trf.xlu0
    %v269 = vpop.trf.xlu0
    %v270 = vpop.trf.xlu0
    %v271 = vpop.trf.xlu0
    %v272 = vpop.trf.xlu0
    %v273 = vpop.trf.xlu0
    %v274 = vpop.trf.xlu0
    %v275 = vpop.trf.xlu0
    %v276 = vpop.trf.xlu0
    %278 = vrot.lane.b32.xlu0 %v41, 32
    %v279 = vpop.permute.xlu0 %278
    %v281 = vsel %vm54, %v139, %v279
    %v283 = vsel %vm215, %v244, 0
    %285 = vmatprep.subr.mxu0 0.0
    %286 = vmatpush1.msra.mxu0 %v281
    %287 = vmatprep.subr.mxu0 0.0
    %288 = vmatpush1.msra.mxu0 0.0
    %289 = vmatprep.subr.mxu0 0.0
    %290 = vmatpush1.msra.mxu0 0.0
    %291 = vmatprep.subr.mxu0 0.0
    %292 = vmatpush1.msra.mxu0 0.0
    %293 = vmatprep.subr.mxu0 0.0
    %294 = vmatpush1.msra.mxu0 0.0
    %295 = vmatprep.subr.mxu0 0.0
    %296 = vmatpush1.msra.mxu0 0.0
    %297 = vmatprep.subr.mxu0 0.0
    %298 = vmatpush1.msra.mxu0 0.0
    %299 = vmatprep.subr.mxu0 0.0
    %300 = vmatpush1.msra.mxu0 0.0
    %301 = vmatprep.subr.mxu0 0.0
    %302 = vmatpush1.msra.mxu0 0.0
    %303 = vmatprep.subr.mxu0 0.0
    %304 = vmatpush1.msra.mxu0 0.0
    %305 = vmatprep.subr.mxu0 0.0
    %306 = vmatpush1.msra.mxu0 0.0
    %307 = vmatprep.subr.mxu0 0.0
    %308 = vmatpush1.msra.mxu0 0.0
    %309 = vmatprep.subr.mxu0 0.0
    %310 = vmatpush1.msra.mxu0 0.0
    %311 = vmatprep.subr.mxu0 0.0
    %312 = vmatpush1.msra.mxu0 0.0
    %313 = vmatprep.subr.mxu0 0.0
    %314 = vmatpush1.msra.mxu0 0.0
    %315 = vmatprep.subr.mxu0 0.0
    %316 = vmatpush1.msra.mxu0 0.0
    %317 = vmatprep.subr.mxu0 0.0
    %318 = vmatpush1.msra.mxu0 0.0
    %319 = vmatprep.subr.mxu0 0.0
    %320 = vmatpush1.msra.mxu0 0.0
    %321 = vmatprep.subr.mxu0 0.0
    %322 = vmatpush1.msra.mxu0 0.0
    %323 = vmatprep.subr.mxu0 0.0
    %324 = vmatpush1.msra.mxu0 0.0
    %325 = vmatprep.subr.mxu0 0.0
    %326 = vmatpush1.msra.mxu0 0.0
    %327 = vmatprep.subr.mxu0 0.0
    %328 = vmatpush1.msra.mxu0 0.0
    %329 = vmatprep.subr.mxu0 0.0
    %330 = vmatpush1.msra.mxu0 0.0
    %331 = vmatprep.subr.mxu0 0.0
    %332 = vmatpush1.msra.mxu0 0.0
    %333 = vmatprep.subr.mxu0 0.0
    %334 = vmatpush1.msra.mxu0 0.0
    %335 = vmatprep.subr.mxu0 0.0
    %336 = vmatpush1.msra.mxu0 0.0
    %337 = vmatprep.subr.mxu0 0.0
    %338 = vmatpush1.msra.mxu0 0.0
    %339 = vmatprep.subr.mxu0 0.0
    %340 = vmatpush1.msra.mxu0 0.0
    %341 = vmatprep.subr.mxu0 0.0
    %342 = vmatpush1.msra.mxu0 0.0
    %343 = vmatprep.subr.mxu0 0.0
    %344 = vmatpush1.msra.mxu0 0.0
    %345 = vmatprep.subr.mxu0 0.0
    %346 = vmatpush1.msra.mxu0 0.0
    %347 = vmatprep.subr.mxu0 0.0
    %348 = vmatpush1.msra.mxu0 0.0
    %349 = vmatprep.mubr.f32.mxu0 0.0
    %350 = vmatmul.mubr.f32.gmra.mrb[0].mxu0 %v283
    %v351 = vpop.f32.mrb[0].mxu0
    %v352 = vadd.f32 0.0, %v351
    %v353 = vpop.f32.mrb[0].mxu0
    %354 = vdwg.mxu0
    %v356 = vsel %vm215, %v261, 0
    %358 = vmatprep.subr.mxu0 0.0
    %359 = vmatpush1.msra.mxu0 %v41
    %360 = vmatprep.subr.mxu0 0.0
    %361 = vmatpush1.msra.mxu0 0.0
    %362 = vmatprep.subr.mxu0 0.0
    %363 = vmatpush1.msra.mxu0 0.0
    %364 = vmatprep.subr.mxu0 0.0
    %365 = vmatpush1.msra.mxu0 0.0
    %366 = vmatprep.subr.mxu0 0.0
    %367 = vmatpush1.msra.mxu0 0.0
    %368 = vmatprep.subr.mxu0 0.0
    %369 = vmatpush1.msra.mxu0 0.0
    %370 = vmatprep.subr.mxu0 0.0
    %371 = vmatpush1.msra.mxu0 0.0
    %372 = vmatprep.subr.mxu0 0.0
    %373 = vmatpush1.msra.mxu0 0.0
    %374 = vmatprep.subr.mxu0 0.0
    %375 = vmatpush1.msra.mxu0 0.0
    %376 = vmatprep.subr.mxu0 0.0
    %377 = vmatpush1.msra.mxu0 0.0
    %378 = vmatprep.subr.mxu0 0.0
    %379 = vmatpush1.msra.mxu0 0.0
    %380 = vmatprep.subr.mxu0 0.0
    %381 = vmatpush1.msra.mxu0 0.0
    %382 = vmatprep.subr.mxu0 0.0
    %383 = vmatpush1.msra.mxu0 0.0
    %384 = vmatprep.subr.mxu0 0.0
    %385 = vmatpush1.msra.mxu0 0.0
    %386 = vmatprep.subr.mxu0 0.0
    %387 = vmatpush1.msra.mxu0 0.0
    %388 = vmatprep.subr.mxu0 0.0
    %389 = vmatpush1.msra.mxu0 0.0
    %390 = vmatprep.subr.mxu0 0.0
    %391 = vmatpush1.msra.mxu0 0.0
    %392 = vmatprep.subr.mxu0 0.0
    %393 = vmatpush1.msra.mxu0 0.0
    %394 = vmatprep.subr.mxu0 0.0
    %395 = vmatpush1.msra.mxu0 0.0
    %396 = vmatprep.subr.mxu0 0.0
    %397 = vmatpush1.msra.mxu0 0.0
    %398 = vmatprep.subr.mxu0 0.0
    %399 = vmatpush1.msra.mxu0 0.0
    %400 = vmatprep.subr.mxu0 0.0
    %401 = vmatpush1.msra.mxu0 0.0
    %402 = vmatprep.subr.mxu0 0.0
    %403 = vmatpush1.msra.mxu0 0.0
    %404 = vmatprep.subr.mxu0 0.0
    %405 = vmatpush1.msra.mxu0 0.0
    %406 = vmatprep.subr.mxu0 0.0
    %407 = vmatpush1.msra.mxu0 0.0
    %408 = vmatprep.subr.mxu0 0.0
    %409 = vmatpush1.msra.mxu0 0.0
    %410 = vmatprep.subr.mxu0 0.0
    %411 = vmatpush1.msra.mxu0 0.0
    %412 = vmatprep.subr.mxu0 0.0
    %413 = vmatpush1.msra.mxu0 0.0
    %414 = vmatprep.subr.mxu0 0.0
    %415 = vmatpush1.msra.mxu0 0.0
    %416 = vmatprep.subr.mxu0 0.0
    %417 = vmatpush1.msra.mxu0 0.0
    %418 = vmatprep.subr.mxu0 0.0
    %419 = vmatpush1.msra.mxu0 0.0
    %420 = vmatprep.subr.mxu0 0.0
    %421 = vmatpush1.msra.mxu0 0.0
    %422 = vmatprep.mubr.f32.mxu0 0.0
    %423 = vmatmul.mubr.f32.gmra.mrb[0].mxu0 %v356
    %v424 = vpop.f32.mrb[0].mxu0
    %v425 = vadd.f32 %v352, %v424
    %v426 = vpop.f32.mrb[0].mxu0
    %427 = vdwg.mxu0
    %428 = vrot.lane.b32.xlu0 %v41, 64
    %v429 = vpop.permute.xlu0 %428
    %vm431 = vcmask 523264
    %v432 = vsel %vm431, %v425, %v429
    %433 = vmatprep.subr.mxu0 0.0
    %434 = vmatpush1.msra.mxu0 %v228
    %435 = vmatprep.subr.mxu0 0.0
    %436 = vmatpush1.msra.mxu0 %v229
    %437 = vmatprep.subr.mxu0 0.0
    %438 = vmatpush1.msra.mxu0 %v230
    %439 = vmatprep.subr.mxu0 0.0
    %440 = vmatpush1.msra.mxu0 %v231
    %441 = vmatprep.subr.mxu0 0.0
    %442 = vmatpush1.msra.mxu0 %v232
    %443 = vmatprep.subr.mxu0 0.0
    %444 = vmatpush1.msra.mxu0 %v233
    %445 = vmatprep.subr.mxu0 0.0
    %446 = vmatpush1.msra.mxu0 %v234
    %447 = vmatprep.subr.mxu0 0.0
    %448 = vmatpush1.msra.mxu0 %v235
    %449 = vmatprep.subr.mxu0 0.0
    %450 = vmatpush1.msra.mxu0 %v236
    %451 = vmatprep.subr.mxu0 0.0
    %452 = vmatpush1.msra.mxu0 %v237
    %453 = vmatprep.subr.mxu0 0.0
    %454 = vmatpush1.msra.mxu0 %v238
    %455 = vmatprep.subr.mxu0 0.0
    %456 = vmatpush1.msra.mxu0 %v239
    %457 = vmatprep.subr.mxu0 0.0
    %458 = vmatpush1.msra.mxu0 %v240
    %459 = vmatprep.subr.mxu0 0.0
    %460 = vmatpush1.msra.mxu0 %v241
    %461 = vmatprep.subr.mxu0 0.0
    %462 = vmatpush1.msra.mxu0 %v242
    %463 = vmatprep.subr.mxu0 0.0
    %464 = vmatpush1.msra.mxu0 %v243
    %465 = vmatprep.subr.mxu0 0.0
    %466 = vmatpush1.msra.mxu0 0.0
    %467 = vmatprep.subr.mxu0 0.0
    %468 = vmatpush1.msra.mxu0 0.0
    %469 = vmatprep.subr.mxu0 0.0
    %470 = vmatpush1.msra.mxu0 0.0
    %471 = vmatprep.subr.mxu0 0.0
    %472 = vmatpush1.msra.mxu0 0.0
    %473 = vmatprep.subr.mxu0 0.0
    %474 = vmatpush1.msra.mxu0 0.0
    %475 = vmatprep.subr.mxu0 0.0
    %476 = vmatpush1.msra.mxu0 0.0
    %477 = vmatprep.subr.mxu0 0.0
    %478 = vmatpush1.msra.mxu0 0.0
    %479 = vmatprep.subr.mxu0 0.0
    %480 = vmatpush1.msra.mxu0 0.0
    %481 = vmatprep.subr.mxu0 0.0
    %482 = vmatpush1.msra.mxu0 0.0
    %483 = vmatprep.subr.mxu0 0.0
    %484 = vmatpush1.msra.mxu0 0.0
    %485 = vmatprep.subr.mxu0 0.0
    %486 = vmatpush1.msra.mxu0 0.0
    %487 = vmatprep.subr.mxu0 0.0
    %488 = vmatpush1.msra.mxu0 0.0
    %489 = vmatprep.subr.mxu0 0.0
    %490 = vmatpush1.msra.mxu0 0.0
    %491 = vmatprep.subr.mxu0 0.0
    %492 = vmatpush1.msra.mxu0 0.0
    %493 = vmatprep.subr.mxu0 0.0
    %494 = vmatpush1.msra.mxu0 0.0
    %495 = vmatprep.subr.mxu0 0.0
    %496 = vmatpush1.msra.mxu0 0.0
    %497 = vmatprep.mubr.f32.mxu0 0.0
    %498 = vmatmul.mubr.f32.gmra.mrb[0].mxu0 %v432
    %v499 = vpop.f32.mrb[0].mxu0
    %v500 = vadd.f32 0.0, %v499
    %v501 = vpop.f32.mrb[0].mxu0
    %502 = vdwg.mxu0
    %vm503 = vcmp.gt.f32.partialorder %v500, 0.0
    %v504 = vmul.f32 %v500, 0.1
    %v505 = vsel %vm503, %v500, %v504
    %v506 = vld [vmem:[%s6] sm:$0xff]
    %v507 = vld [vmem:[%s6 + $0x8] sm:$0xff]
    %v508 = vld [vmem:[%s6 + $0x10] sm:$0xff]
    %v509 = vld [vmem:[%s6 + $0x18] sm:$0xff]
    %v510 = vld [vmem:[%s7] sm:$0x1]
    %v511 = vld [vmem:[%s8] sm:$0x1]
    %v513 = vlaneseq
    %v514 = vshrl.u32 %v513, 7
    %v515 = vsub.s32 0, %v514
    %v516 = vrot.slane %v511, %v515
    %v519 = vsel %vm54, %v505, 0
    %521 = vmatprep.subr.mxu0 0.0
    %522 = vmatpush1.msra.mxu0 %v506
    %523 = vmatprep.subr.mxu0 0.0
    %524 = vmatpush1.msra.mxu0 %v507
    %525 = vmatprep.subr.mxu0 0.0
    %526 = vmatpush1.msra.mxu0 %v508
    %527 = vmatprep.subr.mxu0 0.0
    %528 = vmatpush1.msra.mxu0 %v509
    %529 = vmatprep.subr.mxu0 0.0
    %530 = vmatpush1.msra.mxu0 0.0
    %531 = vmatprep.subr.mxu0 0.0
    %532 = vmatpush1.msra.mxu0 0.0
    %533 = vmatprep.subr.mxu0 0.0
    %534 = vmatpush1.msra.mxu0 0.0
    %535 = vmatprep.subr.mxu0 0.0
    %536 = vmatpush1.msra.mxu0 0.0
    %537 = vmatprep.subr.mxu0 0.0
    %538 = vmatpush1.msra.mxu0 0.0
    %539 = vmatprep.subr.mxu0 0.0
    %540 = vmatpush1.msra.mxu0 0.0
    %541 = vmatprep.subr.mxu0 0.0
    %542 = vmatpush1.msra.mxu0 0.0
    %543 = vmatprep.subr.mxu0 0.0
    %544 = vmatpush1.msra.mxu0 0.0
    %545 = vmatprep.subr.mxu0 0.0
    %546 = vmatpush1.msra.mxu0 0.0
    %547 = vmatprep.subr.mxu0 0.0
    %548 = vmatpush1.msra.mxu0 0.0
    %549 = vmatprep.subr.mxu0 0.0
    %550 = vmatpush1.msra.mxu0 0.0
    %551 = vmatprep.subr.mxu0 0.0
    %552 = vmatpush1.msra.mxu0 0.0
    %553 = vmatprep.subr.mxu0 0.0
    %554 = vmatpush1.msra.mxu0 0.0
    %555 = vmatprep.subr.mxu0 0.0
    %556 = vmatpush1.msra.mxu0 0.0
    %557 = vmatprep.subr.mxu0 0.0
    %558 = vmatpush1.msra.mxu0 0.0
    %559 = vmatprep.subr.mxu0 0.0
    %560 = vmatpush1.msra.mxu0 0.0
    %561 = vmatprep.subr.mxu0 0.0
    %562 = vmatpush1.msra.mxu0 0.0
    %563 = vmatprep.subr.mxu0 0.0
    %564 = vmatpush1.msra.mxu0 0.0
    %565 = vmatprep.subr.mxu0 0.0
    %566 = vmatpush1.msra.mxu0 0.0
    %567 = vmatprep.subr.mxu0 0.0
    %568 = vmatpush1.msra.mxu0 0.0
    %569 = vmatprep.subr.mxu0 0.0
    %570 = vmatpush1.msra.mxu0 0.0
    %571 = vmatprep.subr.mxu0 0.0
    %572 = vmatpush1.msra.mxu0 0.0
    %573 = vmatprep.subr.mxu0 0.0
    %574 = vmatpush1.msra.mxu0 0.0
    %575 = vmatprep.subr.mxu0 0.0
    %576 = vmatpush1.msra.mxu0 0.0
    %577 = vmatprep.subr.mxu0 0.0
    %578 = vmatpush1.msra.mxu0 0.0
    %579 = vmatprep.subr.mxu0 0.0
    %580 = vmatpush1.msra.mxu0 0.0
    %581 = vmatprep.subr.mxu0 0.0
    %582 = vmatpush1.msra.mxu0 0.0
    %583 = vmatprep.subr.mxu0 0.0
    %584 = vmatpush1.msra.mxu0 0.0
    %585 = vmatprep.mubr.f32.mxu0 0.0
    %586 = vmatmul.mubr.f32.gmra.mrb[0].mxu0 %v519
    %v587 = vpop.f32.mrb[0].mxu0
    %v588 = vadd.f32 %v516, %v587
    %v589 = vpop.f32.mrb[0].mxu0
    %590 = vdwg.mxu0
    %v592 = vlaneseq
    %v593 = vshrl.u32 %v592, 7
    %v594 = vsub.s32 0, %v593
    %v595 = vrot.slane %v510, %v594
    %v597 = vmul.f32 %v505, %v595
    %v598 = vsel %vm54, %v597, 0.0
    %599 = vadd.xlane.f32.xlu0 %v598
    %v600 = vpop.xlane.xlu0 %599
    %601 = vrot.lane.b32.xlu0 %v505, 96
    %v602 = vpop.permute.xlu0 %601
    %v604 = vsel %vm54, %v588, 0
    %v606 = vsel %vm54, %v602, 0
    %608 = vmatprep.subr.mxu0 0.0
    %609 = vmatpush1.xpose.msra.mxu0 %v606
    %610 = vmatprep.subr.mxu0 0.0
    %611 = vmatpush1.xpose.msra.mxu0 0.0
    %612 = vmatprep.subr.mxu0 0.0
    %613 = vmatpush1.xpose.msra.mxu0 0.0
    %614 = vmatprep.subr.mxu0 0.0
    %615 = vmatpush1.xpose.msra.mxu0 0.0
    %616 = vmatprep.subr.mxu0 0.0
    %617 = vmatpush1.xpose.msra.mxu0 0.0
    %618 = vmatprep.subr.mxu0 0.0
    %619 = vmatpush1.xpose.msra.mxu0 0.0
    %620 = vmatprep.subr.mxu0 0.0
    %621 = vmatpush1.xpose.msra.mxu0 0.0
    %622 = vmatprep.subr.mxu0 0.0
    %623 = vmatpush1.xpose.msra.mxu0 0.0
    %624 = vmatprep.subr.mxu0 0.0
    %625 = vmatpush1.xpose.msra.mxu0 0.0
    %626 = vmatprep.subr.mxu0 0.0
    %627 = vmatpush1.xpose.msra.mxu0 0.0
    %628 = vmatprep.subr.mxu0 0.0
    %629 = vmatpush1.xpose.msra.mxu0 0.0
    %630 = vmatprep.subr.mxu0 0.0
    %631 = vmatpush1.xpose.msra.mxu0 0.0
    %632 = vmatprep.subr.mxu0 0.0
    %633 = vmatpush1.xpose.msra.mxu0 0.0
    %634 = vmatprep.subr.mxu0 0.0
    %635 = vmatpush1.xpose.msra.mxu0 0.0
    %636 = vmatprep.subr.mxu0 0.0
    %637 = vmatpush1.xpose.msra.mxu0 0.0
    %638 = vmatprep.subr.mxu0 0.0
    %639 = vmatpush1.xpose.msra.mxu0 0.0
    %640 = vmatprep.subr.mxu0 0.0
    %641 = vmatpush1.xpose.msra.mxu0 0.0
    %642 = vmatprep.subr.mxu0 0.0
    %643 = vmatpush1.xpose.msra.mxu0 0.0
    %644 = vmatprep.subr.mxu0 0.0
    %645 = vmatpush1.xpose.msra.mxu0 0.0
    %646 = vmatprep.subr.mxu0 0.0
    %647 = vmatpush1.xpose.msra.mxu0 0.0
    %648 = vmatprep.subr.mxu0 0.0
    %649 = vmatpush1.xpose.msra.mxu0 0.0
    %650 = vmatprep.subr.mxu0 0.0
    %651 = vmatpush1.xpose.msra.mxu0 0.0
    %652 = vmatprep.subr.mxu0 0.0
    %653 = vmatpush1.xpose.msra.mxu0 0.0
    %654 = vmatprep.subr.mxu0 0.0
    %655 = vmatpush1.xpose.msra.mxu0 0.0
    %656 = vmatprep.subr.mxu0 0.0
    %657 = vmatpush1.xpose.msra.mxu0 0.0
    %658 = vmatprep.subr.mxu0 0.0
    %659 = vmatpush1.xpose.msra.mxu0 0.0
    %660 = vmatprep.subr.mxu0 0.0
    %661 = vmatpush1.xpose.msra.mxu0 0.0
    %662 = vmatprep.subr.mxu0 0.0
    %663 = vmatpush1.xpose.msra.mxu0 0.0
    %664 = vmatprep.subr.mxu0 0.0
    %665 = vmatpush1.xpose.msra.mxu0 0.0
    %666 = vmatprep.subr.mxu0 0.0
    %667 = vmatpush1.xpose.msra.mxu0 0.0
    %668 = vmatprep.subr.mxu0 0.0
    %669 = vmatpush1.xpose.msra.mxu0 0.0
    %670 = vmatprep.subr.mxu0 0.0
    %671 = vmatpush1.xpose.msra.mxu0 0.0
    %672 = vmatprep.mubr.f32.mxu0 0.0
    %673 = vmatmul.mubr.f32.gmra.mrb[0].mxu0 %v604
    %v674 = vpop.f32.mrb[0].mxu0
    %v675 = vadd.f32 %v600, %v674
    %v676 = vpop.f32.mrb[0].mxu0
    %677 = vdwg.mxu0
    %v678 = vsel %vm215, %v675, -inf
    %679 = vmax.xlane.f32.xlu0 %v678
    %v680 = vpop.xlane.xlu0 %679
    %v681 = vsub.f32 %v675, %v680
    %v682 = vmul.f32 %v681, 1.442695
    %v683 = vpow.pop %v682
    %v684 = vsel %vm215, %v683, 0.0
    %685 = vadd.xlane.f32.xlu0 %v684
    %v686 = vpop.xlane.xlu0 %685
    %v687 = vrcp.pop %v686
    %v688 = vmul.f32 %v683, %v687
    %689 = vst.msk [vmem:[#allocation4] sm:$0xff] %vm215, %v688
    %v690 = vld [vmem:[%s9] sm:$0xff]
    %v691 = vld [vmem:[%s9 + $0x8] sm:$0xff]
    %v692 = vld [vmem:[%s9 + $0x10] sm:$0xff]
    %v693 = vld [vmem:[%s9 + $0x18] sm:$0xff]
    %v694 = vld [vmem:[%s9 + $0x20] sm:$0xff]
    %v695 = vld [vmem:[%s9 + $0x28] sm:$0xff]
    %v696 = vld [vmem:[%s9 + $0x30] sm:$0xff]
    %v697 = vld [vmem:[%s9 + $0x38] sm:$0xff]
    %v698 = vld [vmem:[%s9 + $0x40] sm:$0xff]
    %v699 = vld [vmem:[%s9 + $0x48] sm:$0xff]
    %v700 = vld [vmem:[%s9 + $0x50] sm:$0xff]
    %v701 = vld [vmem:[%s9 + $0x58] sm:$0xff]
    %v702 = vld [vmem:[%s9 + $0x60] sm:$0xff]
    %v703 = vld [vmem:[%s9 + $0x68] sm:$0xff]
    %v704 = vld [vmem:[%s9 + $0x70] sm:$0xff]
    %v705 = vld [vmem:[%s9 + $0x78] sm:$0xff]
    %v706 = vmul.f32 %v688, %v40
    %707 = vxpose.xlu0.b32.start [1/16] %v706, 128
    %708 = vxpose.xlu0.b32.cont [2/16] 0.0, 128
    %709 = vxpose.xlu0.b32.cont [3/16] 0.0, 128
    %710 = vxpose.xlu0.b32.cont [4/16] 0.0, 128
    %711 = vxpose.xlu0.b32.cont [5/16] 0.0, 128
    %712 = vxpose.xlu0.b32.cont [6/16] 0.0, 128
    %713 = vxpose.xlu0.b32.cont [7/16] 0.0, 128
    %714 = vxpose.xlu0.b32.cont [8/16] 0.0, 128
    %715 = vxpose.xlu0.b32.cont [9/16] 0.0, 128
    %716 = vxpose.xlu0.b32.cont [10/16] 0.0, 128
    %717 = vxpose.xlu0.b32.cont [11/16] 0.0, 128
    %718 = vxpose.xlu0.b32.cont [12/16] 0.0, 128
    %719 = vxpose.xlu0.b32.cont [13/16] 0.0, 128
    %720 = vxpose.xlu0.b32.cont [14/16] 0.0, 128
    %721 = vxpose.xlu0.b32.cont [15/16] 0.0, 128
    %722 = vxpose.xlu0.b32.end [16/16] 0.0, 128
    %v723 = vpop.trf.xlu0
    %v724 = vpop.trf.xlu0
    %v725 = vpop.trf.xlu0
    %v726 = vpop.trf.xlu0
    %v727 = vpop.trf.xlu0
    %v728 = vpop.trf.xlu0
    %v729 = vpop.trf.xlu0
    %v730 = vpop.trf.xlu0
    %v731 = vpop.trf.xlu0
    %v732 = vpop.trf.xlu0
    %v733 = vpop.trf.xlu0
    %v734 = vpop.trf.xlu0
    %v735 = vpop.trf.xlu0
    %v736 = vpop.trf.xlu0
    %v737 = vpop.trf.xlu0
    %v738 = vpop.trf.xlu0
    %740 = vrot.lane.b32.xlu0 %v505, 32
    %v741 = vpop.permute.xlu0 %740
    %v743 = vsel %vm54, %v602, %v741
    %v745 = vsel %vm215, %v706, 0
    %747 = vmatprep.subr.mxu0 0.0
    %748 = vmatpush1.msra.mxu0 %v743
    %749 = vmatprep.subr.mxu0 0.0
    %750 = vmatpush1.msra.mxu0 0.0
    %751 = vmatprep.subr.mxu0 0.0
    %752 = vmatpush1.msra.mxu0 0.0
    %753 = vmatprep.subr.mxu0 0.0
    %754 = vmatpush1.msra.mxu0 0.0
    %755 = vmatprep.subr.mxu0 0.0
    %756 = vmatpush1.msra.mxu0 0.0
    %757 = vmatprep.subr.mxu0 0.0
    %758 = vmatpush1.msra.mxu0 0.0
    %759 = vmatprep.subr.mxu0 0.0
    %760 = vmatpush1.msra.mxu0 0.0
    %761 = vmatprep.subr.mxu0 0.0
    %762 = vmatpush1.msra.mxu0 0.0
    %763 = vmatprep.subr.mxu0 0.0
    %764 = vmatpush1.msra.mxu0 0.0
    %765 = vmatprep.subr.mxu0 0.0
    %766 = vmatpush1.msra.mxu0 0.0
    %767 = vmatprep.subr.mxu0 0.0
    %768 = vmatpush1.msra.mxu0 0.0
    %769 = vmatprep.subr.mxu0 0.0
    %770 = vmatpush1.msra.mxu0 0.0
    %771 = vmatprep.subr.mxu0 0.0
    %772 = vmatpush1.msra.mxu0 0.0
    %773 = vmatprep.subr.mxu0 0.0
    %774 = vmatpush1.msra.mxu0 0.0
    %775 = vmatprep.subr.mxu0 0.0
    %776 = vmatpush1.msra.mxu0 0.0
    %777 = vmatprep.subr.mxu0 0.0
    %778 = vmatpush1.msra.mxu0 0.0
    %779 = vmatprep.subr.mxu0 0.0
    %780 = vmatpush1.msra.mxu0 0.0
    %781 = vmatprep.subr.mxu0 0.0
    %782 = vmatpush1.msra.mxu0 0.0
    %783 = vmatprep.subr.mxu0 0.0
    %784 = vmatpush1.msra.mxu0 0.0
    %785 = vmatprep.subr.mxu0 0.0
    %786 = vmatpush1.msra.mxu0 0.0
    %787 = vmatprep.subr.mxu0 0.0
    %788 = vmatpush1.msra.mxu0 0.0
    %789 = vmatprep.subr.mxu0 0.0
    %790 = vmatpush1.msra.mxu0 0.0
    %791 = vmatprep.subr.mxu0 0.0
    %792 = vmatpush1.msra.mxu0 0.0
    %793 = vmatprep.subr.mxu0 0.0
    %794 = vmatpush1.msra.mxu0 0.0
    %795 = vmatprep.subr.mxu0 0.0
    %796 = vmatpush1.msra.mxu0 0.0
    %797 = vmatprep.subr.mxu0 0.0
    %798 = vmatpush1.msra.mxu0 0.0
    %799 = vmatprep.subr.mxu0 0.0
    %800 = vmatpush1.msra.mxu0 0.0
    %801 = vmatprep.subr.mxu0 0.0
    %802 = vmatpush1.msra.mxu0 0.0
    %803 = vmatprep.subr.mxu0 0.0
    %804 = vmatpush1.msra.mxu0 0.0
    %805 = vmatprep.subr.mxu0 0.0
    %806 = vmatpush1.msra.mxu0 0.0
    %807 = vmatprep.subr.mxu0 0.0
    %808 = vmatpush1.msra.mxu0 0.0
    %809 = vmatprep.subr.mxu0 0.0
    %810 = vmatpush1.msra.mxu0 0.0
    %811 = vmatprep.mubr.f32.mxu0 0.0
    %812 = vmatmul.mubr.f32.gmra.mrb[0].mxu0 %v745
    %v813 = vpop.f32.mrb[0].mxu0
    %v814 = vadd.f32 0.0, %v813
    %v815 = vpop.f32.mrb[0].mxu0
    %816 = vdwg.mxu0
    %v818 = vsel %vm215, %v723, 0
    %820 = vmatprep.subr.mxu0 0.0
    %821 = vmatpush1.msra.mxu0 %v505
    %822 = vmatprep.subr.mxu0 0.0
    %823 = vmatpush1.msra.mxu0 0.0
    %824 = vmatprep.subr.mxu0 0.0
    %825 = vmatpush1.msra.mxu0 0.0
    %826 = vmatprep.subr.mxu0 0.0
    %827 = vmatpush1.msra.mxu0 0.0
    %828 = vmatprep.subr.mxu0 0.0
    %829 = vmatpush1.msra.mxu0 0.0
    %830 = vmatprep.subr.mxu0 0.0
    %831 = vmatpush1.msra.mxu0 0.0
    %832 = vmatprep.subr.mxu0 0.0
    %833 = vmatpush1.msra.mxu0 0.0
    %834 = vmatprep.subr.mxu0 0.0
    %835 = vmatpush1.msra.mxu0 0.0
    %836 = vmatprep.subr.mxu0 0.0
    %837 = vmatpush1.msra.mxu0 0.0
    %838 = vmatprep.subr.mxu0 0.0
    %839 = vmatpush1.msra.mxu0 0.0
    %840 = vmatprep.subr.mxu0 0.0
    %841 = vmatpush1.msra.mxu0 0.0
    %842 = vmatprep.subr.mxu0 0.0
    %843 = vmatpush1.msra.mxu0 0.0
    %844 = vmatprep.subr.mxu0 0.0
    %845 = vmatpush1.msra.mxu0 0.0
    %846 = vmatprep.subr.mxu0 0.0
    %847 = vmatpush1.msra.mxu0 0.0
    %848 = vmatprep.subr.mxu0 0.0
    %849 = vmatpush1.msra.mxu0 0.0
    %850 = vmatprep.subr.mxu0 0.0
    %851 = vmatpush1.msra.mxu0 0.0
    %852 = vmatprep.subr.mxu0 0.0
    %853 = vmatpush1.msra.mxu0 0.0
    %854 = vmatprep.subr.mxu0 0.0
    %855 = vmatpush1.msra.mxu0 0.0
    %856 = vmatprep.subr.mxu0 0.0
    %857 = vmatpush1.msra.mxu0 0.0
    %858 = vmatprep.subr.mxu0 0.0
    %859 = vmatpush1.msra.mxu0 0.0
    %860 = vmatprep.subr.mxu0 0.0
    %861 = vmatpush1.msra.mxu0 0.0
    %862 = vmatprep.subr.mxu0 0.0
    %863 = vmatpush1.msra.mxu0 0.0
    %864 = vmatprep.subr.mxu0 0.0
    %865 = vmatpush1.msra.mxu0 0.0
    %866 = vmatprep.subr.mxu0 0.0
    %867 = vmatpush1.msra.mxu0 0.0
    %868 = vmatprep.subr.mxu0 0.0
    %869 = vmatpush1.msra.mxu0 0.0
    %870 = vmatprep.subr.mxu0 0.0
    %871 = vmatpush1.msra.mxu0 0.0
    %872 = vmatprep.subr.mxu0 0.0
    %873 = vmatpush1.msra.mxu0 0.0
    %874 = vmatprep.subr.mxu0 0.0
    %875 = vmatpush1.msra.mxu0 0.0
    %876 = vmatprep.subr.mxu0 0.0
    %877 = vmatpush1.msra.mxu0 0.0
    %878 = vmatprep.subr.mxu0 0.0
    %879 = vmatpush1.msra.mxu0 0.0
    %880 = vmatprep.subr.mxu0 0.0
    %881 = vmatpush1.msra.mxu0 0.0
    %882 = vmatprep.subr.mxu0 0.0
    %883 = vmatpush1.msra.mxu0 0.0
    %884 = vmatprep.mubr.f32.mxu0 0.0
    %885 = vmatmul.mubr.f32.gmra.mrb[0].mxu0 %v818
    %v886 = vpop.f32.mrb[0].mxu0
    %v887 = vadd.f32 %v814, %v886
    %v888 = vpop.f32.mrb[0].mxu0
    %889 = vdwg.mxu0
    %890 = vrot.lane.b32.xlu0 %v505, 64
    %v891 = vpop.permute.xlu0 %890
    %v893 = vsel %vm431, %v887, %v891
    %894 = vmatprep.subr.mxu0 0.0
    %895 = vmatpush1.msra.mxu0 %v690
    %896 = vmatprep.subr.mxu0 0.0
    %897 = vmatpush1.msra.mxu0 %v691
    %898 = vmatprep.subr.mxu0 0.0
    %899 = vmatpush1.msra.mxu0 %v692
    %900 = vmatprep.subr.mxu0 0.0
    %901 = vmatpush1.msra.mxu0 %v693
    %902 = vmatprep.subr.mxu0 0.0
    %903 = vmatpush1.msra.mxu0 %v694
    %904 = vmatprep.subr.mxu0 0.0
    %905 = vmatpush1.msra.mxu0 %v695
    %906 = vmatprep.subr.mxu0 0.0
    %907 = vmatpush1.msra.mxu0 %v696
    %908 = vmatprep.subr.mxu0 0.0
    %909 = vmatpush1.msra.mxu0 %v697
    %910 = vmatprep.subr.mxu0 0.0
    %911 = vmatpush1.msra.mxu0 %v698
    %912 = vmatprep.subr.mxu0 0.0
    %913 = vmatpush1.msra.mxu0 %v699
    %914 = vmatprep.subr.mxu0 0.0
    %915 = vmatpush1.msra.mxu0 %v700
    %916 = vmatprep.subr.mxu0 0.0
    %917 = vmatpush1.msra.mxu0 %v701
    %918 = vmatprep.subr.mxu0 0.0
    %919 = vmatpush1.msra.mxu0 %v702
    %920 = vmatprep.subr.mxu0 0.0
    %921 = vmatpush1.msra.mxu0 %v703
    %922 = vmatprep.subr.mxu0 0.0
    %923 = vmatpush1.msra.mxu0 %v704
    %924 = vmatprep.subr.mxu0 0.0
    %925 = vmatpush1.msra.mxu0 %v705
    %926 = vmatprep.subr.mxu0 0.0
    %927 = vmatpush1.msra.mxu0 0.0
    %928 = vmatprep.subr.mxu0 0.0
    %929 = vmatpush1.msra.mxu0 0.0
    %930 = vmatprep.subr.mxu0 0.0
    %931 = vmatpush1.msra.mxu0 0.0
    %932 = vmatprep.subr.mxu0 0.0
    %933 = vmatpush1.msra.mxu0 0.0
    %934 = vmatprep.subr.mxu0 0.0
    %935 = vmatpush1.msra.mxu0 0.0
    %936 = vmatprep.subr.mxu0 0.0
    %937 = vmatpush1.msra.mxu0 0.0
    %938 = vmatprep.subr.mxu0 0.0
    %939 = vmatpush1.msra.mxu0 0.0
    %940 = vmatprep.subr.mxu0 0.0
    %941 = vmatpush1.msra.mxu0 0.0
    %942 = vmatprep.subr.mxu0 0.0
    %943 = vmatpush1.msra.mxu0 0.0
    %944 = vmatprep.subr.mxu0 0.0
    %945 = vmatpush1.msra.mxu0 0.0
    %946 = vmatprep.subr.mxu0 0.0
    %947 = vmatpush1.msra.mxu0 0.0
    %948 = vmatprep.subr.mxu0 0.0
    %949 = vmatpush1.msra.mxu0 0.0
    %950 = vmatprep.subr.mxu0 0.0
    %951 = vmatpush1.msra.mxu0 0.0
    %952 = vmatprep.subr.mxu0 0.0
    %953 = vmatpush1.msra.mxu0 0.0
    %954 = vmatprep.subr.mxu0 0.0
    %955 = vmatpush1.msra.mxu0 0.0
    %956 = vmatprep.subr.mxu0 0.0
    %957 = vmatpush1.msra.mxu0 0.0
    %958 = vmatprep.mubr.f32.mxu0 0.0
    %959 = vmatmul.mubr.f32.gmra.mrb[0].mxu0 %v893
    %v960 = vpop.f32.mrb[0].mxu0
    %v961 = vadd.f32 0.0, %v960
    %v962 = vpop.f32.mrb[0].mxu0
    %963 = vdwg.mxu0
    %vm964 = vcmp.gt.f32.partialorder %v961, 0.0
    %v965 = vmul.f32 %v961, 0.1
    %v966 = vsel %vm964, %v961, %v965
    %967 = vst.msk [vmem:[%s10] sm:$0xff] %vm431, %v966
    // Predicated region
    $region42: #{gnn_layer.1} parent=1 // pred_check
      _
    $region43: #{gnn_layer.1} parent=1 // pred_check_branch
      %969 = sbr.rel (0) target = $region45
    $region44: #{gnn_layer.1} parent=1 // pred_region
      _
    $region45: #{gnn_layer.1} parent=1 // pred_fallthru
      _
    // Predicated region
    $region46: #{gnn_layer.1} parent=1 // pred_check
      _
    $region47: #{gnn_layer.1} parent=1 // pred_check_branch
      %971 = sbr.rel (0) target = $region49
    $region48: #{gnn_layer.1} parent=1 // pred_region
      %s973 = ssub.s32 128, 128
      %974 = vsyncadd [#allocation3], %s973
      %s976 = sshll.u32 [#allocation2], 4
      %s977 = int_to_ptr.vmem [resolvable:$true] %s976
      %979 = dma.vmem_to_hbm [thread:$0]  %s977, 128, %s11, [#allocation3]
    $region49: #{gnn_layer.1} parent=1 // pred_fallthru
      _
    // Predicated region
    $region50: #{gnn_layer.1} parent=1 // pred_check
      _
    $region51: #{gnn_layer.1} parent=1 // pred_check_branch
      %981 = sbr.rel (0) target = $region53
    $region52: #{gnn_layer.1} parent=1 // pred_region
      %s983 = ssub.s32 128, 128
      %984 = vsyncadd [#allocation5], %s983
      %s986 = sshll.u32 [#allocation4], 4
      %s987 = int_to_ptr.vmem [resolvable:$true] %s986
      %989 = dma.vmem_to_hbm [thread:$0]  %s987, 128, %s12, [#allocation5]
    $region53: #{gnn_layer.1} parent=1 // pred_fallthru
      _
    // Predicated region
    $region54: #{gnn_layer.1} parent=1 // pred_check
      _
    $region55: #{gnn_layer.1} parent=1 // pred_check_branch
      %991 = sbr.rel (0) target = $region57
    $region56: #{gnn_layer.1} parent=1 // pred_region
      _
    $region57: #{gnn_layer.1} parent=1 // pred_fallthru
      _
    // Predicated region
    $region58: #{gnn_layer.1} parent=1 // pred_check
      _
    $region59: #{gnn_layer.1} parent=1 // pred_check_branch
      %993 = sbr.rel (0) target = $region61
    $region60: #{gnn_layer.1} parent=1 // pred_region
      %994 = dma.done [#allocation3], 128
    $region61: #{gnn_layer.1} parent=1 // pred_fallthru
      _
    // Predicated region
    $region62: #{gnn_layer.1} parent=1 // pred_check
      _
    $region63: #{gnn_layer.1} parent=1 // pred_check_branch
      %996 = sbr.rel (0) target = $region65
    $region64: #{gnn_layer.1} parent=1 // pred_region
      %997 = dma.done [#allocation5], 128
    $region65: #{gnn_layer.1} parent=1 // pred_fallthru
      _
    %998 = vsyncpa [#allocation3], 1
    %999 = vsyncpa [#allocation5], 1

</llo_original>
